<compile_context>
chip_gen: v7x
topology: tpu7x:2x2x1
jax: 0.10.0
libtpu: 0.0.40
codegen_flags: <defaults>
</compile_context>

<pallas_src>
import math

import jax
import jax.numpy as jnp
from jax.experimental import pallas as pl
from jax.experimental.pallas import tpu as pltpu

# --- hyperparameters (small, consistent with the module's __init__) ---
VOCAB = 128
D_MODEL = 32
NUM_HEADS = 4
FF_HIDDEN = 64
HEAD_DIM = D_MODEL // NUM_HEADS
SEQ = 8
BATCH = 2
N_ROWS = SEQ * BATCH          # 16 stacked rows, seq-major: r = s*BATCH + b
LN_EPS = 1e-5

# --- packed parameter slab: one (224, 128) f32 array, every operand 8-row aligned ---
SLAB_COLS = 128
SLAB_ROWS = 224
OFF_EMBT  = (0, 0)      # (32, 128)  embedding table transposed (D, VOCAB), lane-dense
OFF_WQKV  = (32, 0)     # (32, 96)   Wq|Wk|Wv  (Wq pre-scaled by 1/sqrt(HEAD_DIM))
OFF_WO    = (32, 96)    # (32, 32)
OFF_WOUT  = (64, 0)     # (32, 128)  LM head with LayerNorm2 gamma folded in
OFF_WFF1  = (96, 0)     # (32, 64)
OFF_MASK  = (96, 64)    # (16, 64)   additive block-diag causal mask, tiled per head (0 / -1e30)
OFF_BFF1  = (112, 64)   # (16, 64)   pre-broadcast
OFF_WFF2  = (128, 0)    # (64, 32)
OFF_VMASK = (128, 32)   # (64, 32)   0/1 head-block selector for K/V expansion + softmax denoms
OFF_PE    = (128, 64)   # (16, 32)   positional encoding, pre-expanded per stacked row
OFF_BO    = (128, 96)   # (16, 32)
OFF_G1    = (144, 64)   # (16, 32)
OFF_BE1   = (144, 96)   # (16, 32)
OFF_BFF2  = (160, 64)   # (16, 32)
OFF_BQKV  = (192, 0)    # (16, 96)   (bq pre-scaled by 1/sqrt(HEAD_DIM))
OFF_BOUT  = (208, 0)    # (16, 128)  LM head bias with LayerNorm2 beta folded in

# contract dim-1 of LHS with dim-1 of RHS (i.e. A @ B.T on the MXU, no explicit transpose)
_DN_T = (((1,), (1,)), ((), ()))


def _slab(w_ref, off, shape):
    r0, c0 = off
    rr, cc = shape
    return w_ref[r0:r0 + rr, c0:c0 + cc]


def causal_mask(sz):
    """float mask: 0 on/below diagonal, -inf above (same as generate_square_subsequent_mask)."""
    i = jnp.arange(sz)[:, None]
    j = jnp.arange(sz)[None, :]
    return jnp.where(j <= i, 0.0, -jnp.inf).astype(jnp.float32)


# ------------------------- Pallas kernel -------------------------
def _decoder_kernel(tok_ref, w_ref, o_ref):
    f32 = jnp.float32
    N, D, H, HD, FF = N_ROWS, D_MODEL, NUM_HEADS, HEAD_DIM, FF_HIDDEN

    # --- fused embedding gather (one-hot @ emb^T on the MXU, lane-dense table) + PE ---
    tok = tok_ref[...]                                                     # (N, 1) int32
    vocab_ids = jax.lax.broadcasted_iota(jnp.int32, (N, VOCAB), 1)
    onehot = (tok == vocab_ids).astype(f32)                                # (N, 128)
    emb_t = _slab(w_ref, OFF_EMBT, (D, VOCAB))                             # (32, 128)
    x = jax.lax.dot_general(onehot, emb_t, _DN_T, preferred_element_type=f32)   # (N, D)
    x = x + _slab(w_ref, OFF_PE, (N, D))

    # --- fused QKV projection (score scale folded into Wq/bq at pack time) ---
    qkv = jnp.dot(x, _slab(w_ref, OFF_WQKV, (D, 3 * D)),
                  preferred_element_type=f32) + _slab(w_ref, OFF_BQKV, (N, 3 * D))
    q = qkv[:, 0:D]
    k = qkv[:, D:2 * D]
    v = qkv[:, 2 * D:3 * D]

    # --- block-diagonal wide attention: all heads in one matmul each ---
    vmask = _slab(w_ref, OFF_VMASK, (H * N, D))          # (64, 32) 0/1 head-block selector
    k_bd = jnp.tile(k, (H, 1)) * vmask                   # (64, 32) block-diag K
    v_bd = jnp.tile(v, (H, 1)) * vmask                   # (64, 32) block-diag V
    s = jax.lax.dot_general(q, k_bd, _DN_T, preferred_element_type=f32)    # (16, 64) all-head scores
    s = s + _slab(w_ref, OFF_MASK, (N, H * N))           # additive block-diag causal mask
    # consolidated softmax: one global per-row max (constant within each head segment -> exact)
    p = jnp.exp(s - jnp.max(s, axis=-1, keepdims=True))                    # masked entries -> exactly 0
    hv = jnp.dot(p, v_bd, preferred_element_type=f32)                      # (16, 32) = concat_h(p_h @ v_h)
    denom = jnp.dot(p, vmask, preferred_element_type=f32)                  # per-head denominators, head-tiled
    hv = hv * pl.reciprocal(denom)                                         # exact reciprocal (not approx)
    attn = jnp.dot(hv, _slab(w_ref, OFF_WO, (D, D)),
                   preferred_element_type=f32) + _slab(w_ref, OFF_BO, (N, D))

    # --- residual + LayerNorm1 ---
    x = x + attn
    mu = jnp.mean(x, axis=-1, keepdims=True)
    var = jnp.mean((x - mu) ** 2, axis=-1, keepdims=True)
    x = (x - mu) * jax.lax.rsqrt(var + LN_EPS) * _slab(w_ref, OFF_G1, (N, D)) \
        + _slab(w_ref, OFF_BE1, (N, D))

    # --- feed forward: linear2(relu(linear1(x))) ---
    h1 = jnp.dot(x, _slab(w_ref, OFF_WFF1, (D, FF)),
                 preferred_element_type=f32) + _slab(w_ref, OFF_BFF1, (N, FF))
    h1 = jnp.maximum(h1, 0.0)
    ff = jnp.dot(h1, _slab(w_ref, OFF_WFF2, (FF, D)),
                 preferred_element_type=f32) + _slab(w_ref, OFF_BFF2, (N, D))

    # --- residual + LayerNorm2 (gamma/beta folded into the LM head at pack time) ---
    x = x + ff
    mu = jnp.mean(x, axis=-1, keepdims=True)
    var = jnp.mean((x - mu) ** 2, axis=-1, keepdims=True)
    xn = (x - mu) * jax.lax.rsqrt(var + LN_EPS)

    # --- LM head + log_softmax (lane-dense: VOCAB = 128) ---
    logits = jnp.dot(xn, _slab(w_ref, OFF_WOUT, (D, VOCAB)),
                     preferred_element_type=f32) + _slab(w_ref, OFF_BOUT, (N, VOCAB))
    m2 = jnp.max(logits, axis=-1, keepdims=True)
    z = logits - m2
    lse = jnp.log(jnp.sum(jnp.exp(z), axis=-1, keepdims=True))
    o_ref[...] = z - lse                                                   # (N, VOCAB)


# ------------------------- wrapper -------------------------
@jax.jit
def transformer_decoder_forward(tokens, slab):
    """tokens: (seq, batch) int32, slab: packed params -> log-probs (seq, batch, vocab) f32."""
    S, B = tokens.shape
    assert S == SEQ and B == BATCH
    tok = tokens.astype(jnp.int32).reshape(S * B, 1)      # seq-major rows r = s*B + b (free reshape)
    out = pl.pallas_call(
        _decoder_kernel,
        out_shape=jax.ShapeDtypeStruct((S * B, VOCAB), jnp.float32),
        in_specs=[pl.BlockSpec(memory_space=pltpu.MemorySpace.VMEM),
                  pl.BlockSpec(memory_space=pltpu.MemorySpace.VMEM)],
        out_specs=pl.BlockSpec(memory_space=pltpu.MemorySpace.VMEM),
        cost_estimate=pl.CostEstimate(
            flops=720_896,
            transcendentals=4_096,
            bytes_accessed=SLAB_ROWS * SLAB_COLS * 4 + S * B * (VOCAB + 1) * 4),
    )(tok, slab)
    # TODO(synk): for batched production workloads add a leading row-block grid axis with
    # dimension_semantics=("parallel",) so v7x's second TensorCore is used; moot at 16 rows.
    return out.reshape(S, B, VOCAB)                       # row-major reshape: (seq, batch, vocab)


# ------------------------- parameter init + packing -------------------------
def init_params(key):
    ks = jax.random.split(key, 12)

    def nrm(k, shape, scale=0.05):
        return (scale * jax.random.normal(k, shape)).astype(jnp.float32)

    max_len = 512
    position = jnp.arange(max_len, dtype=jnp.float32)[:, None]
    div_term = jnp.exp(jnp.arange(0, D_MODEL, 2, dtype=jnp.float32)
                       * (-math.log(10000.0) / D_MODEL))
    pe = jnp.zeros((max_len, D_MODEL), jnp.float32)
    pe = pe.at[:, 0::2].set(jnp.sin(position * div_term))
    pe = pe.at[:, 1::2].set(jnp.cos(position * div_term))

    return dict(
        embedding=nrm(ks[0], (VOCAB, D_MODEL), 1.0),
        pe=pe,
        # weights stored transposed (in_features, out_features) so the kernel does x @ W
        wqkv=nrm(ks[1], (D_MODEL, 3 * D_MODEL)),
        bqkv=nrm(ks[2], (1, 3 * D_MODEL)),
        wo=nrm(ks[3], (D_MODEL, D_MODEL)),
        bo=nrm(ks[4], (1, D_MODEL)),
        g1=jnp.ones((1, D_MODEL), jnp.float32),
        be1=jnp.zeros((1, D_MODEL), jnp.float32),
        wff1=nrm(ks[5], (D_MODEL, FF_HIDDEN)),
        bff1=nrm(ks[6], (1, FF_HIDDEN)),
        wff2=nrm(ks[7], (FF_HIDDEN, D_MODEL)),
        bff2=nrm(ks[8], (1, D_MODEL)),
        g2=jnp.ones((1, D_MODEL), jnp.float32),
        be2=jnp.zeros((1, D_MODEL), jnp.float32),
        wout=nrm(ks[9], (D_MODEL, VOCAB)),
        bout=nrm(ks[10], (1, VOCAB)),
    )


def pack_params(p):
    """Pack all params + precomputed constants into one lane-dense (224, 128) f32 slab."""
    N = N_ROWS
    scale = 1.0 / math.sqrt(HEAD_DIM)

    # fold the attention score scale into the Q projection (exact algebra)
    wqkv = p['wqkv'].at[:, 0:D_MODEL].multiply(scale)
    bqkv = p['bqkv'].at[:, 0:D_MODEL].multiply(scale)

    # fold LayerNorm2 gamma/beta into the LM head (exact algebra)
    wout = p['g2'][0][:, None] * p['wout']
    bout = p['bout'] + p['be2'] @ p['wout']

    # additive block-diag causal mask over stacked seq-major rows, tiled once per head
    r = jnp.arange(N)
    c = jnp.arange(N)
    allowed = ((r[:, None] % BATCH) == (c[None, :] % BATCH)) & \
              ((c[None, :] // BATCH) <= (r[:, None] // BATCH))
    mask16 = jnp.where(allowed, 0.0, -1e30).astype(jnp.float32)
    mask_bd = jnp.tile(mask16, (1, NUM_HEADS))                      # (16, 64)

    # 0/1 block-diagonal head selector used for K/V expansion and softmax denominators
    rows = jnp.arange(NUM_HEADS * N)
    cols = jnp.arange(D_MODEL)
    vmask = ((rows[:, None] // N) == (cols[None, :] // HEAD_DIM)).astype(jnp.float32)   # (64, 32)

    pe_rows = jnp.repeat(p['pe'][:SEQ], BATCH, axis=0)              # row r = s*B + b gets pe[s]

    def rep(b):  # pre-broadcast a 1-row param to all N rows (no in-kernel sublane broadcast)
        return jnp.tile(jnp.asarray(b, jnp.float32), (N, 1))

    entries = [
        (OFF_EMBT, p['embedding'].T),
        (OFF_WQKV, wqkv), (OFF_WO, p['wo']),
        (OFF_WOUT, wout),
        (OFF_WFF1, p['wff1']), (OFF_MASK, mask_bd), (OFF_BFF1, rep(p['bff1'])),
        (OFF_WFF2, p['wff2']), (OFF_VMASK, vmask),
        (OFF_PE, pe_rows), (OFF_BO, rep(p['bo'])),
        (OFF_G1, rep(p['g1'])), (OFF_BE1, rep(p['be1'])),
        (OFF_BFF2, rep(p['bff2'])),
        (OFF_BQKV, rep(bqkv)),
        (OFF_BOUT, rep(bout)),
    ]
    slab = jnp.zeros((SLAB_ROWS, SLAB_COLS), jnp.float32)
    for (r0, c0), a in entries:
        a = jnp.asarray(a, jnp.float32)
        rr, cc = a.shape
        slab = slab.at[r0:r0 + rr, c0:c0 + cc].set(a)
    return slab


# ------------------------- pure-JAX reference -------------------------
def ref_forward(tokens, p):
    S, B = tokens.shape
    x = p['embedding'][tokens].astype(jnp.float32) + p['pe'][:S][:, None, :]
    x = jnp.transpose(x, (1, 0, 2))                              # (B, S, D)
    mask = causal_mask(S)
    qkv = x @ p['wqkv'] + p['bqkv'][0]
    q, k, v = jnp.split(qkv, 3, axis=-1)
    q = q.reshape(B, S, NUM_HEADS, HEAD_DIM)
    k = k.reshape(B, S, NUM_HEADS, HEAD_DIM)
    v = v.reshape(B, S, NUM_HEADS, HEAD_DIM)
    s = jnp.einsum('bqhd,bkhd->bhqk', q, k) / math.sqrt(HEAD_DIM) + mask
    w = jax.nn.softmax(s, axis=-1)
    attn = jnp.einsum('bhqk,bkhd->bqhd', w, v).reshape(B, S, D_MODEL)
    attn = attn @ p['wo'] + p['bo'][0]

    def ln(y, g, b):
        mu = jnp.mean(y, -1, keepdims=True)
        var = jnp.mean((y - mu) ** 2, -1, keepdims=True)
        return (y - mu) / jnp.sqrt(var + LN_EPS) * g[0] + b[0]

    x = ln(x + attn, p['g1'], p['be1'])
    ff = jnp.maximum(x @ p['wff1'] + p['bff1'][0], 0.0) @ p['wff2'] + p['bff2'][0]
    x = ln(x + ff, p['g2'], p['be2'])
    logits = x @ p['wout'] + p['bout'][0]
    out = jax.nn.log_softmax(logits, axis=-1)
    return jnp.transpose(out, (1, 0, 2))                         # (S, B, VOCAB)


if __name__ == "__main__":
    key = jax.random.PRNGKey(0)
    kp, kt = jax.random.split(key)
    params = init_params(kp)
    slab = pack_params(params)                                   # one-time host-side packing
    tokens = jax.random.randint(kt, (SEQ, BATCH), 0, VOCAB, dtype=jnp.int32)

    out = jax.block_until_ready(transformer_decoder_forward(tokens, slab))
    ref = jax.block_until_ready(ref_forward(tokens, params))
    assert out.shape == (SEQ, BATCH, VOCAB)
    max_err = float(jnp.max(jnp.abs(out - ref)))
    assert jnp.allclose(out, ref, atol=2e-4, rtol=2e-4), max_err

    print("KERNEL_OK")
</pallas_src>

<mosaic_0001>
module attributes {stable_mosaic.version = 11 : i64} {
  func.func @_decoder_kernel(%arg0: memref<16x1xi32, #tpu.memory_space<vmem>>, %arg1: memref<224x128xf32, #tpu.memory_space<vmem>>, %arg2: memref<16x128xf32, #tpu.memory_space<vmem>>) attributes {dimension_semantics = [], scalar_prefetch = 0 : i64, scratch_operands = 0 : i64, tpu.core_type = #tpu.core_type<tc>} {
    %c0 = arith.constant 0 : index
    %c0_0 = arith.constant 0 : index
    %0 = vector.load %arg0[%c0, %c0_0] : memref<16x1xi32, #tpu.memory_space<vmem>>, vector<16x1xi32>
    %1 = tpu.iota {dimensions = array<i32: 1>} : vector<16x128xi32>
    %2 = vector.broadcast %0 : vector<16x1xi32> to vector<16x128xi32>
    %3 = arith.cmpi eq, %2, %1 : vector<16x128xi32>
    %4 = arith.extui %3 : vector<16x128xi1> to vector<16x128xi32>
    %5 = arith.sitofp %4 : vector<16x128xi32> to vector<16x128xf32>
    %c0_1 = arith.constant 0 : index
    %c0_2 = arith.constant 0 : index
    %6 = vector.load %arg1[%c0_1, %c0_2] : memref<224x128xf32, #tpu.memory_space<vmem>>, vector<32x128xf32>
    %cst = arith.constant dense<0.000000e+00> : vector<16x32xf32>
    %7 = tpu.matmul %5, %6, %cst {dimension_numbers = #tpu.dot_dimension_numbers<[1], [1], [0], [0], [0, 0, 1, 0], [], []>} : vector<16x128xf32>, vector<32x128xf32>, vector<16x32xf32> -> vector<16x32xf32>
    %c128 = arith.constant 128 : index
    %c64 = arith.constant 64 : index
    %8 = vector.load %arg1[%c128, %c64] : memref<224x128xf32, #tpu.memory_space<vmem>>, vector<16x32xf32>
    %9 = arith.addf %7, %8 : vector<16x32xf32>
    %c32 = arith.constant 32 : index
    %c0_3 = arith.constant 0 : index
    %10 = vector.load %arg1[%c32, %c0_3] : memref<224x128xf32, #tpu.memory_space<vmem>>, vector<32x96xf32>
    %cst_4 = arith.constant dense<0.000000e+00> : vector<16x96xf32>
    %11 = tpu.matmul %9, %10, %cst_4 {dimension_numbers = #tpu.dot_dimension_numbers<[1], [0], [0], [1], [0, 0, 1, 1], [], []>} : vector<16x32xf32>, vector<32x96xf32>, vector<16x96xf32> -> vector<16x96xf32>
    %c192 = arith.constant 192 : index
    %c0_5 = arith.constant 0 : index
    %12 = vector.load %arg1[%c192, %c0_5] : memref<224x128xf32, #tpu.memory_space<vmem>>, vector<16x96xf32>
    %13 = arith.addf %11, %12 : vector<16x96xf32>
    %14 = vector.extract_strided_slice %13 {offsets = [0, 0], sizes = [16, 32], strides = [1, 1]} : vector<16x96xf32> to vector<16x32xf32>
    %15 = vector.extract_strided_slice %13 {offsets = [0, 32], sizes = [16, 32], strides = [1, 1]} : vector<16x96xf32> to vector<16x32xf32>
    %16 = vector.extract_strided_slice %13 {offsets = [0, 64], sizes = [16, 32], strides = [1, 1]} : vector<16x96xf32> to vector<16x32xf32>
    %c128_6 = arith.constant 128 : index
    %c32_7 = arith.constant 32 : index
    %17 = vector.load %arg1[%c128_6, %c32_7] : memref<224x128xf32, #tpu.memory_space<vmem>>, vector<64x32xf32>
    %18 = tpu.concatenate %15, %15, %15, %15 in 0 : vector<16x32xf32>, vector<16x32xf32>, vector<16x32xf32>, vector<16x32xf32> -> vector<64x32xf32>
    %19 = arith.mulf %18, %17 : vector<64x32xf32>
    %20 = tpu.concatenate %16, %16, %16, %16 in 0 : vector<16x32xf32>, vector<16x32xf32>, vector<16x32xf32>, vector<16x32xf32> -> vector<64x32xf32>
    %21 = arith.mulf %20, %17 : vector<64x32xf32>
    %cst_8 = arith.constant dense<0.000000e+00> : vector<16x64xf32>
    %22 = tpu.matmul %14, %19, %cst_8 {dimension_numbers = #tpu.dot_dimension_numbers<[1], [1], [0], [0], [0, 0, 1, 0], [], []>} : vector<16x32xf32>, vector<64x32xf32>, vector<16x64xf32> -> vector<16x64xf32>
    %c96 = arith.constant 96 : index
    %c64_9 = arith.constant 64 : index
    %23 = vector.load %arg1[%c96, %c64_9] : memref<224x128xf32, #tpu.memory_space<vmem>>, vector<16x64xf32>
    %24 = arith.addf %22, %23 : vector<16x64xf32>
    %cst_10 = arith.constant dense<0xFF800000> : vector<16xf32>
    %25 = vector.multi_reduction <maximumf>, %24, %cst_10 [1] : vector<16x64xf32> to vector<16xf32>
    %26 = vector.shape_cast %25 : vector<16xf32> to vector<16x1xf32>
    %27 = vector.broadcast %26 : vector<16x1xf32> to vector<16x64xf32>
    %28 = arith.subf %24, %27 : vector<16x64xf32>
    %29 = math.exp %28 : vector<16x64xf32>
    %cst_11 = arith.constant dense<0.000000e+00> : vector<16x32xf32>
    %30 = tpu.matmul %29, %21, %cst_11 {dimension_numbers = #tpu.dot_dimension_numbers<[1], [0], [0], [1], [0, 0, 1, 1], [], []>} : vector<16x64xf32>, vector<64x32xf32>, vector<16x32xf32> -> vector<16x32xf32>
    %cst_12 = arith.constant dense<0.000000e+00> : vector<16x32xf32>
    %31 = tpu.matmul %29, %17, %cst_12 {dimension_numbers = #tpu.dot_dimension_numbers<[1], [0], [0], [1], [0, 0, 1, 1], [], []>} : vector<16x64xf32>, vector<64x32xf32>, vector<16x32xf32> -> vector<16x32xf32>
    %32 = tpu.reciprocal %31 : vector<16x32xf32> -> vector<16x32xf32>
    %33 = arith.mulf %30, %32 : vector<16x32xf32>
    %c32_13 = arith.constant 32 : index
    %c96_14 = arith.constant 96 : index
    %34 = vector.load %arg1[%c32_13, %c96_14] : memref<224x128xf32, #tpu.memory_space<vmem>>, vector<32x32xf32>
    %cst_15 = arith.constant dense<0.000000e+00> : vector<16x32xf32>
    %35 = tpu.matmul %33, %34, %cst_15 {dimension_numbers = #tpu.dot_dimension_numbers<[1], [0], [0], [1], [0, 0, 1, 1], [], []>} : vector<16x32xf32>, vector<32x32xf32>, vector<16x32xf32> -> vector<16x32xf32>
    %c128_16 = arith.constant 128 : index
    %c96_17 = arith.constant 96 : index
    %36 = vector.load %arg1[%c128_16, %c96_17] : memref<224x128xf32, #tpu.memory_space<vmem>>, vector<16x32xf32>
    %37 = arith.addf %35, %36 : vector<16x32xf32>
    %38 = arith.addf %9, %37 : vector<16x32xf32>
    %cst_18 = arith.constant dense<0.000000e+00> : vector<16xf32>
    %39 = vector.multi_reduction <add>, %38, %cst_18 [1] : vector<16x32xf32> to vector<16xf32>
    %40 = vector.shape_cast %39 : vector<16xf32> to vector<16x1xf32>
    %cst_19 = arith.constant 3.200000e+01 : f32
    %41 = vector.broadcast %cst_19 : f32 to vector<16x1xf32>
    %42 = arith.divf %40, %41 : vector<16x1xf32>
    %43 = vector.broadcast %42 : vector<16x1xf32> to vector<16x32xf32>
    %44 = arith.subf %38, %43 : vector<16x32xf32>
    %45 = arith.mulf %44, %44 : vector<16x32xf32>
    %cst_20 = arith.constant dense<0.000000e+00> : vector<16xf32>
    %46 = vector.multi_reduction <add>, %45, %cst_20 [1] : vector<16x32xf32> to vector<16xf32>
    %47 = vector.shape_cast %46 : vector<16xf32> to vector<16x1xf32>
    %cst_21 = arith.constant 3.200000e+01 : f32
    %48 = vector.broadcast %cst_21 : f32 to vector<16x1xf32>
    %49 = arith.divf %47, %48 : vector<16x1xf32>
    %50 = vector.broadcast %42 : vector<16x1xf32> to vector<16x32xf32>
    %51 = arith.subf %38, %50 : vector<16x32xf32>
    %cst_22 = arith.constant 9.99999974E-6 : f32
    %52 = vector.broadcast %cst_22 : f32 to vector<16x1xf32>
    %53 = arith.addf %49, %52 : vector<16x1xf32>
    %54 = math.rsqrt %53 : vector<16x1xf32>
    %55 = vector.broadcast %54 : vector<16x1xf32> to vector<16x32xf32>
    %56 = arith.mulf %51, %55 : vector<16x32xf32>
    %c144 = arith.constant 144 : index
    %c64_23 = arith.constant 64 : index
    %57 = vector.load %arg1[%c144, %c64_23] : memref<224x128xf32, #tpu.memory_space<vmem>>, vector<16x32xf32>
    %58 = arith.mulf %56, %57 : vector<16x32xf32>
    %c144_24 = arith.constant 144 : index
    %c96_25 = arith.constant 96 : index
    %59 = vector.load %arg1[%c144_24, %c96_25] : memref<224x128xf32, #tpu.memory_space<vmem>>, vector<16x32xf32>
    %60 = arith.addf %58, %59 : vector<16x32xf32>
    %c96_26 = arith.constant 96 : index
    %c0_27 = arith.constant 0 : index
    %61 = vector.load %arg1[%c96_26, %c0_27] : memref<224x128xf32, #tpu.memory_space<vmem>>, vector<32x64xf32>
    %cst_28 = arith.constant dense<0.000000e+00> : vector<16x64xf32>
    %62 = tpu.matmul %60, %61, %cst_28 {dimension_numbers = #tpu.dot_dimension_numbers<[1], [0], [0], [1], [0, 0, 1, 1], [], []>} : vector<16x32xf32>, vector<32x64xf32>, vector<16x64xf32> -> vector<16x64xf32>
    %c112 = arith.constant 112 : index
    %c64_29 = arith.constant 64 : index
    %63 = vector.load %arg1[%c112, %c64_29] : memref<224x128xf32, #tpu.memory_space<vmem>>, vector<16x64xf32>
    %64 = arith.addf %62, %63 : vector<16x64xf32>
    %cst_30 = arith.constant 0.000000e+00 : f32
    %65 = vector.broadcast %cst_30 : f32 to vector<16x64xf32>
    %66 = arith.maximumf %64, %65 : vector<16x64xf32>
    %c128_31 = arith.constant 128 : index
    %c0_32 = arith.constant 0 : index
    %67 = vector.load %arg1[%c128_31, %c0_32] : memref<224x128xf32, #tpu.memory_space<vmem>>, vector<64x32xf32>
    %cst_33 = arith.constant dense<0.000000e+00> : vector<16x32xf32>
    %68 = tpu.matmul %66, %67, %cst_33 {dimension_numbers = #tpu.dot_dimension_numbers<[1], [0], [0], [1], [0, 0, 1, 1], [], []>} : vector<16x64xf32>, vector<64x32xf32>, vector<16x32xf32> -> vector<16x32xf32>
    %c160 = arith.constant 160 : index
    %c64_34 = arith.constant 64 : index
    %69 = vector.load %arg1[%c160, %c64_34] : memref<224x128xf32, #tpu.memory_space<vmem>>, vector<16x32xf32>
    %70 = arith.addf %68, %69 : vector<16x32xf32>
    %71 = arith.addf %60, %70 : vector<16x32xf32>
    %cst_35 = arith.constant dense<0.000000e+00> : vector<16xf32>
    %72 = vector.multi_reduction <add>, %71, %cst_35 [1] : vector<16x32xf32> to vector<16xf32>
    %73 = vector.shape_cast %72 : vector<16xf32> to vector<16x1xf32>
    %cst_36 = arith.constant 3.200000e+01 : f32
    %74 = vector.broadcast %cst_36 : f32 to vector<16x1xf32>
    %75 = arith.divf %73, %74 : vector<16x1xf32>
    %76 = vector.broadcast %75 : vector<16x1xf32> to vector<16x32xf32>
    %77 = arith.subf %71, %76 : vector<16x32xf32>
    %78 = arith.mulf %77, %77 : vector<16x32xf32>
    %cst_37 = arith.constant dense<0.000000e+00> : vector<16xf32>
    %79 = vector.multi_reduction <add>, %78, %cst_37 [1] : vector<16x32xf32> to vector<16xf32>
    %80 = vector.shape_cast %79 : vector<16xf32> to vector<16x1xf32>
    %cst_38 = arith.constant 3.200000e+01 : f32
    %81 = vector.broadcast %cst_38 : f32 to vector<16x1xf32>
    %82 = arith.divf %80, %81 : vector<16x1xf32>
    %83 = vector.broadcast %75 : vector<16x1xf32> to vector<16x32xf32>
    %84 = arith.subf %71, %83 : vector<16x32xf32>
    %cst_39 = arith.constant 9.99999974E-6 : f32
    %85 = vector.broadcast %cst_39 : f32 to vector<16x1xf32>
    %86 = arith.addf %82, %85 : vector<16x1xf32>
    %87 = math.rsqrt %86 : vector<16x1xf32>
    %88 = vector.broadcast %87 : vector<16x1xf32> to vector<16x32xf32>
    %89 = arith.mulf %84, %88 : vector<16x32xf32>
    %c64_40 = arith.constant 64 : index
    %c0_41 = arith.constant 0 : index
    %90 = vector.load %arg1[%c64_40, %c0_41] : memref<224x128xf32, #tpu.memory_space<vmem>>, vector<32x128xf32>
    %cst_42 = arith.constant dense<0.000000e+00> : vector<16x128xf32>
    %91 = tpu.matmul %89, %90, %cst_42 {dimension_numbers = #tpu.dot_dimension_numbers<[1], [0], [0], [1], [0, 0, 1, 1], [], []>} : vector<16x32xf32>, vector<32x128xf32>, vector<16x128xf32> -> vector<16x128xf32>
    %c208 = arith.constant 208 : index
    %c0_43 = arith.constant 0 : index
    %92 = vector.load %arg1[%c208, %c0_43] : memref<224x128xf32, #tpu.memory_space<vmem>>, vector<16x128xf32>
    %93 = arith.addf %91, %92 : vector<16x128xf32>
    %cst_44 = arith.constant dense<0xFF800000> : vector<16xf32>
    %94 = vector.multi_reduction <maximumf>, %93, %cst_44 [1] : vector<16x128xf32> to vector<16xf32>
    %95 = vector.shape_cast %94 : vector<16xf32> to vector<16x1xf32>
    %96 = vector.broadcast %95 : vector<16x1xf32> to vector<16x128xf32>
    %97 = arith.subf %93, %96 : vector<16x128xf32>
    %98 = math.exp %97 : vector<16x128xf32>
    %cst_45 = arith.constant dense<0.000000e+00> : vector<16xf32>
    %99 = vector.multi_reduction <add>, %98, %cst_45 [1] : vector<16x128xf32> to vector<16xf32>
    %100 = vector.shape_cast %99 : vector<16xf32> to vector<16x1xf32>
    %101 = math.log %100 : vector<16x1xf32>
    %102 = vector.broadcast %101 : vector<16x1xf32> to vector<16x128xf32>
    %103 = arith.subf %97, %102 : vector<16x128xf32>
    %c0_46 = arith.constant 0 : index
    %c0_47 = arith.constant 0 : index
    %104 = vector.load %arg2[%c0_46, %c0_47] : memref<16x128xf32, #tpu.memory_space<vmem>>, vector<16x128xf32>
    tpu.vector_store %arg2[%c0_46, %c0_47], %103 {strides = array<i32>} : memref<16x128xf32, #tpu.memory_space<vmem>>, vector<16x128xf32>,
    return
  }
}

</mosaic_0001>

<llo_original>
// kernel: transformer_decoder_forward.1
$region0: #{transformer_decoder_forward.1}
  #allocation0 [shape = 'u32[]', space=smem, size = 0x4, offset = 0x4, fixed_abs, tag = 'smem constant byte address 0x4 - core index']
  #allocation1 [shape = 'u32[144,128]{1,0:T(1,128)}', space=vmem, size = 0x12000, scoped, tag = 'internal scratch']
  %s0 = inlined_call_operand.vmem [shape: s32[16,1], index: 0, kind: input, shape index: {}]
  %s1 = inlined_call_operand.hbm [shape: f32[224,128], index: 1, kind: input, shape index: {}]
  %s2 = inlined_call_operand.hbm [shape: f32[16,128], index: 2, kind: output, shape index: {}]
  %s3 = sld [smem:[#allocation0]]
  $region22: #{transformer_decoder_forward.1} parent=0
    _
  %s5 = ssub.s32 1, %s3
  %s6 = scalar_select 0, %s5, %s3
  $region1: #{transformer_decoder_forward.1} parent=0
    #allocation2 [shape = 'u8[114688]{0}', space=vmem, size = 0x1c000, scoped, tag = 'input window, operand 1, single buffered']
    #allocation3 [shape = 's32[1]{0}', space=sflag, size = 0x4, scoped, tag = 'scoped memory for transformer_decoder_forward.1']
    #allocation4 [shape = 's32[1]{0}', space=sflag, size = 0x4, scoped, tag = 'scoped memory for transformer_decoder_forward.1']
    #allocation5 [shape = 'u8[8192]{0}', space=vmem, size = 0x2000, scoped, tag = 'output window, operand 0, single buffered']
    %7 = vsyncpa [#allocation3], 0
    %8 = vsyncpa [#allocation4], 0
    // Predicated region
    $region2: #{transformer_decoder_forward.1} parent=1 // pred_check
      _
    $region3: #{transformer_decoder_forward.1} parent=1 // pred_check_branch
      %10 = sbr.rel (0) target = $region5
    $region4: #{transformer_decoder_forward.1} parent=1 // pred_region
      _
    $region5: #{transformer_decoder_forward.1} parent=1 // pred_fallthru
      _
    // Predicated region
    $region6: #{transformer_decoder_forward.1} parent=1 // pred_check
      _
    $region7: #{transformer_decoder_forward.1} parent=1 // pred_check_branch
      %12 = sbr.rel (0) target = $region9
    $region8: #{transformer_decoder_forward.1} parent=1 // pred_region
      %s14 = ssub.s32 3584, 3584
      %15 = vsyncadd [#allocation3], %s14
      %s16 = sshll.u32 [#allocation2], 4
      %s17 = int_to_ptr.vmem [resolvable:$true] %s16
      %22 = dma.hbm_to_vmem [thread:$0]  %s1, 3584, %s17, [#allocation3], 128, 128, 8
    $region9: #{transformer_decoder_forward.1} parent=1 // pred_fallthru
      _
    // Predicated region
    $region10: #{transformer_decoder_forward.1} parent=1 // pred_check
      _
    $region11: #{transformer_decoder_forward.1} parent=1 // pred_check_branch
      %24 = sbr.rel (0) target = $region13
    $region12: #{transformer_decoder_forward.1} parent=1 // pred_region
      %25 = dma.done [#allocation3], 3584
    $region13: #{transformer_decoder_forward.1} parent=1 // pred_fallthru
      _
    %v26 = vld [vmem:[%s0] sm:$0xff]
    %v27 = vld [vmem:[%s0 + $0x8] sm:$0xff]
    %v28 = vlaneseq
    %v29 = vand.u32 %v28, 127
    %30 = vset.pattern.permute.xlu0 0
    %31 = vperm.xlu0 %30, %v26
    %v32 = vpop.permute.xlu0 %31
    %33 = vset.pattern.permute.xlu0 0
    %34 = vperm.xlu0 %33, %v27
    %v35 = vpop.permute.xlu0 %34
    %vm36 = vcmp.eq.s32.totalorder %v32, %v29
    %vm37 = vcmp.eq.s32.totalorder %v35, %v29
    %v38 = vsel %vm36, 1, 0
    %v39 = vsel %vm37, 1, 0
    %v40 = vcvt.s32.f32 %v38
    %v41 = vcvt.s32.f32 %v39
    %v42 = vld [vmem:[#allocation2] sm:$0xff]
    %v43 = vld [vmem:[#allocation2 + $0x8] sm:$0xff]
    %v44 = vld [vmem:[#allocation2 + $0x10] sm:$0xff]
    %v45 = vld [vmem:[#allocation2 + $0x18] sm:$0xff]
    %v46 = vld [vmem:[#allocation2 + $0x80] sm:$0xff]
    %v47 = vld [vmem:[#allocation2 + $0x88] sm:$0xff]
    %50 = vrot.lane.b32.xlu0 %v46, 64
    %v51 = vpop.permute.xlu0 %50
    %52 = vrot.lane.b32.xlu0 %v47, 64
    %v53 = vpop.permute.xlu0 %52
    %56 = vmatprep.subr.mxu0 0.0
    %57 = vmatpush1.xpose.msra.mxu0 %v42
    %58 = vmatprep.subr.mxu0 0.0
    %59 = vmatpush1.xpose.msra.mxu0 %v43
    %60 = vmatprep.subr.mxu0 0.0
    %61 = vmatpush1.xpose.msra.mxu0 %v44
    %62 = vmatprep.subr.mxu0 0.0
    %63 = vmatpush1.xpose.msra.mxu0 %v45
    %64 = vmatprep.subr.mxu0 0.0
    %65 = vmatpush1.xpose.msra.mxu0 0.0
    %66 = vmatprep.subr.mxu0 0.0
    %67 = vmatpush1.xpose.msra.mxu0 0.0
    %68 = vmatprep.subr.mxu0 0.0
    %69 = vmatpush1.xpose.msra.mxu0 0.0
    %70 = vmatprep.subr.mxu0 0.0
    %71 = vmatpush1.xpose.msra.mxu0 0.0
    %72 = vmatprep.subr.mxu0 0.0
    %73 = vmatpush1.xpose.msra.mxu0 0.0
    %74 = vmatprep.subr.mxu0 0.0
    %75 = vmatpush1.xpose.msra.mxu0 0.0
    %76 = vmatprep.subr.mxu0 0.0
    %77 = vmatpush1.xpose.msra.mxu0 0.0
    %78 = vmatprep.subr.mxu0 0.0
    %79 = vmatpush1.xpose.msra.mxu0 0.0
    %80 = vmatprep.subr.mxu0 0.0
    %81 = vmatpush1.xpose.msra.mxu0 0.0
    %82 = vmatprep.subr.mxu0 0.0
    %83 = vmatpush1.xpose.msra.mxu0 0.0
    %84 = vmatprep.subr.mxu0 0.0
    %85 = vmatpush1.xpose.msra.mxu0 0.0
    %86 = vmatprep.subr.mxu0 0.0
    %87 = vmatpush1.xpose.msra.mxu0 0.0
    %88 = vmatprep.subr.mxu0 0.0
    %89 = vmatpush1.xpose.msra.mxu0 0.0
    %90 = vmatprep.subr.mxu0 0.0
    %91 = vmatpush1.xpose.msra.mxu0 0.0
    %92 = vmatprep.subr.mxu0 0.0
    %93 = vmatpush1.xpose.msra.mxu0 0.0
    %94 = vmatprep.subr.mxu0 0.0
    %95 = vmatpush1.xpose.msra.mxu0 0.0
    %96 = vmatprep.subr.mxu0 0.0
    %97 = vmatpush1.xpose.msra.mxu0 0.0
    %98 = vmatprep.subr.mxu0 0.0
    %99 = vmatpush1.xpose.msra.mxu0 0.0
    %100 = vmatprep.subr.mxu0 0.0
    %101 = vmatpush1.xpose.msra.mxu0 0.0
    %102 = vmatprep.subr.mxu0 0.0
    %103 = vmatpush1.xpose.msra.mxu0 0.0
    %104 = vmatprep.subr.mxu0 0.0
    %105 = vmatpush1.xpose.msra.mxu0 0.0
    %106 = vmatprep.subr.mxu0 0.0
    %107 = vmatpush1.xpose.msra.mxu0 0.0
    %108 = vmatprep.subr.mxu0 0.0
    %109 = vmatpush1.xpose.msra.mxu0 0.0
    %110 = vmatprep.subr.mxu0 0.0
    %111 = vmatpush1.xpose.msra.mxu0 0.0
    %112 = vmatprep.subr.mxu0 0.0
    %113 = vmatpush1.xpose.msra.mxu0 0.0
    %114 = vmatprep.subr.mxu0 0.0
    %115 = vmatpush1.xpose.msra.mxu0 0.0
    %116 = vmatprep.subr.mxu0 0.0
    %117 = vmatpush1.xpose.msra.mxu0 0.0
    %118 = vmatprep.subr.mxu0 0.0
    %119 = vmatpush1.xpose.msra.mxu0 0.0
    %120 = vmatprep.mubr.f32.mxu0 0.0
    %121 = vmatmul.mubr.f32.gmra.mrb[0].mxu0 %v40
    %v122 = vpop.f32.mrb[0].mxu0
    %v123 = vadd.f32 %v51, %v122
    %v124 = vpop.f32.mrb[0].mxu0
    %125 = vmatprep.mubr.f32.mxu0 0.0
    %126 = vmatmul.mubr.f32.gmra.mrb[0].mxu0 %v41
    %v127 = vpop.f32.mrb[0].mxu0
    %v128 = vadd.f32 %v53, %v127
    %v129 = vpop.f32.mrb[0].mxu0
    %130 = vdwg.mxu0
    %v131 = vld [vmem:[#allocation2 + $0x20] sm:$0xff]
    %v132 = vld [vmem:[#allocation2 + $0x28] sm:$0xff]
    %v133 = vld [vmem:[#allocation2 + $0x30] sm:$0xff]
    %v134 = vld [vmem:[#allocation2 + $0x38] sm:$0xff]
    %v135 = vld [vmem:[#allocation2 + $0xc0] sm:$0xff]
    %v136 = vld [vmem:[#allocation2 + $0xc8] sm:$0xff]
    %vm137 = vcmask 261120
    %v139 = vsel %vm137, %v123, 0
    %v142 = vsel %vm137, %v128, 0
    %144 = vmatprep.subr.mxu0 0.0
    %145 = vmatpush1.msra.mxu0 %v131
    %146 = vmatprep.subr.mxu0 0.0
    %147 = vmatpush1.msra.mxu0 %v132
    %148 = vmatprep.subr.mxu0 0.0
    %149 = vmatpush1.msra.mxu0 %v133
    %150 = vmatprep.subr.mxu0 0.0
    %151 = vmatpush1.msra.mxu0 %v134
    %152 = vmatprep.subr.mxu0 0.0
    %153 = vmatpush1.msra.mxu0 0.0
    %154 = vmatprep.subr.mxu0 0.0
    %155 = vmatpush1.msra.mxu0 0.0
    %156 = vmatprep.subr.mxu0 0.0
    %157 = vmatpush1.msra.mxu0 0.0
    %158 = vmatprep.subr.mxu0 0.0
    %159 = vmatpush1.msra.mxu0 0.0
    %160 = vmatprep.subr.mxu0 0.0
    %161 = vmatpush1.msra.mxu0 0.0
    %162 = vmatprep.subr.mxu0 0.0
    %163 = vmatpush1.msra.mxu0 0.0
    %164 = vmatprep.subr.mxu0 0.0
    %165 = vmatpush1.msra.mxu0 0.0
    %166 = vmatprep.subr.mxu0 0.0
    %167 = vmatpush1.msra.mxu0 0.0
    %168 = vmatprep.subr.mxu0 0.0
    %169 = vmatpush1.msra.mxu0 0.0
    %170 = vmatprep.subr.mxu0 0.0
    %171 = vmatpush1.msra.mxu0 0.0
    %172 = vmatprep.subr.mxu0 0.0
    %173 = vmatpush1.msra.mxu0 0.0
    %174 = vmatprep.subr.mxu0 0.0
    %175 = vmatpush1.msra.mxu0 0.0
    %176 = vmatprep.subr.mxu0 0.0
    %177 = vmatpush1.msra.mxu0 0.0
    %178 = vmatprep.subr.mxu0 0.0
    %179 = vmatpush1.msra.mxu0 0.0
    %180 = vmatprep.subr.mxu0 0.0
    %181 = vmatpush1.msra.mxu0 0.0
    %182 = vmatprep.subr.mxu0 0.0
    %183 = vmatpush1.msra.mxu0 0.0
    %184 = vmatprep.subr.mxu0 0.0
    %185 = vmatpush1.msra.mxu0 0.0
    %186 = vmatprep.subr.mxu0 0.0
    %187 = vmatpush1.msra.mxu0 0.0
    %188 = vmatprep.subr.mxu0 0.0
    %189 = vmatpush1.msra.mxu0 0.0
    %190 = vmatprep.subr.mxu0 0.0
    %191 = vmatpush1.msra.mxu0 0.0
    %192 = vmatprep.subr.mxu0 0.0
    %193 = vmatpush1.msra.mxu0 0.0
    %194 = vmatprep.subr.mxu0 0.0
    %195 = vmatpush1.msra.mxu0 0.0
    %196 = vmatprep.subr.mxu0 0.0
    %197 = vmatpush1.msra.mxu0 0.0
    %198 = vmatprep.subr.mxu0 0.0
    %199 = vmatpush1.msra.mxu0 0.0
    %200 = vmatprep.subr.mxu0 0.0
    %201 = vmatpush1.msra.mxu0 0.0
    %202 = vmatprep.subr.mxu0 0.0
    %203 = vmatpush1.msra.mxu0 0.0
    %204 = vmatprep.subr.mxu0 0.0
    %205 = vmatpush1.msra.mxu0 0.0
    %206 = vmatprep.subr.mxu0 0.0
    %207 = vmatpush1.msra.mxu0 0.0
    %208 = vmatprep.mubr.f32.mxu0 0.0
    %209 = vmatmul.mubr.f32.gmra.mrb[0].mxu0 %v139
    %v210 = vpop.f32.mrb[0].mxu0
    %v211 = vadd.f32 %v135, %v210
    %v212 = vpop.f32.mrb[0].mxu0
    %213 = vmatprep.mubr.f32.mxu0 0.0
    %214 = vmatmul.mubr.f32.gmra.mrb[0].mxu0 %v142
    %v215 = vpop.f32.mrb[0].mxu0
    %v216 = vadd.f32 %v136, %v215
    %v217 = vpop.f32.mrb[0].mxu0
    %218 = vdwg.mxu0
    %v219 = vld [vmem:[#allocation2 + $0x80] sm:$0xff]
    %v220 = vld [vmem:[#allocation2 + $0x88] sm:$0xff]
    %v221 = vld [vmem:[#allocation2 + $0x90] sm:$0xff]
    %v222 = vld [vmem:[#allocation2 + $0x98] sm:$0xff]
    %v223 = vld [vmem:[#allocation2 + $0xa0] sm:$0xff]
    %v224 = vld [vmem:[#allocation2 + $0xa8] sm:$0xff]
    %v225 = vld [vmem:[#allocation2 + $0xb0] sm:$0xff]
    %v226 = vld [vmem:[#allocation2 + $0xb8] sm:$0xff]
    %v227 = vmul.f32 %v211, %v219
    %v228 = vmul.f32 %v216, %v220
    %v229 = vmul.f32 %v211, %v221
    %v230 = vmul.f32 %v216, %v222
    %v231 = vmul.f32 %v211, %v223
    %v232 = vmul.f32 %v216, %v224
    %v233 = vmul.f32 %v211, %v225
    %v234 = vmul.f32 %v216, %v226
    %243 = vrot.lane.b32.xlu0 %v219, 32
    %v244 = vpop.permute.xlu0 %243
    %245 = vrot.lane.b32.xlu0 %v220, 32
    %v246 = vpop.permute.xlu0 %245
    %247 = vrot.lane.b32.xlu0 %v221, 32
    %v248 = vpop.permute.xlu0 %247
    %249 = vrot.lane.b32.xlu0 %v222, 32
    %v250 = vpop.permute.xlu0 %249
    %251 = vrot.lane.b32.xlu0 %v223, 32
    %v252 = vpop.permute.xlu0 %251
    %253 = vrot.lane.b32.xlu0 %v224, 32
    %v254 = vpop.permute.xlu0 %253
    %255 = vrot.lane.b32.xlu0 %v225, 32
    %v256 = vpop.permute.xlu0 %255
    %257 = vrot.lane.b32.xlu0 %v226, 32
    %v258 = vpop.permute.xlu0 %257
    %v267 = vmul.f32 %v211, %v244
    %v268 = vmul.f32 %v216, %v246
    %v269 = vmul.f32 %v211, %v248
    %v270 = vmul.f32 %v216, %v250
    %v271 = vmul.f32 %v211, %v252
    %v272 = vmul.f32 %v216, %v254
    %v273 = vmul.f32 %v211, %v256
    %v274 = vmul.f32 %v216, %v258
    %v275 = vld [vmem:[#allocation2 + $0x60] sm:$0xff]
    %v276 = vld [vmem:[#allocation2 + $0x68] sm:$0xff]
    %285 = vrot.lane.b32.xlu0 %v227, 96
    %v286 = vpop.permute.xlu0 %285
    %287 = vrot.lane.b32.xlu0 %v228, 96
    %v288 = vpop.permute.xlu0 %287
    %289 = vrot.lane.b32.xlu0 %v229, 96
    %v290 = vpop.permute.xlu0 %289
    %291 = vrot.lane.b32.xlu0 %v230, 96
    %v292 = vpop.permute.xlu0 %291
    %293 = vrot.lane.b32.xlu0 %v231, 96
    %v294 = vpop.permute.xlu0 %293
    %295 = vrot.lane.b32.xlu0 %v232, 96
    %v296 = vpop.permute.xlu0 %295
    %297 = vrot.lane.b32.xlu0 %v233, 96
    %v298 = vpop.permute.xlu0 %297
    %299 = vrot.lane.b32.xlu0 %v234, 96
    %v300 = vpop.permute.xlu0 %299
    %303 = vrot.lane.b32.xlu0 %v275, 64
    %v304 = vpop.permute.xlu0 %303
    %305 = vrot.lane.b32.xlu0 %v276, 64
    %v306 = vpop.permute.xlu0 %305
    %v310 = vsel %vm137, %v211, 0
    %v313 = vsel %vm137, %v216, 0
    %v315 = vsel %vm137, %v286, 0
    %v317 = vsel %vm137, %v288, 0
    %v319 = vsel %vm137, %v290, 0
    %v321 = vsel %vm137, %v292, 0
    %v323 = vsel %vm137, %v294, 0
    %v325 = vsel %vm137, %v296, 0
    %v327 = vsel %vm137, %v298, 0
    %v329 = vsel %vm137, %v300, 0
    %331 = vmatprep.subr.mxu0 0.0
    %332 = vmatpush1.xpose.msra.mxu0 %v315
    %333 = vmatprep.subr.mxu0 0.0
    %334 = vmatpush1.xpose.msra.mxu0 %v317
    %335 = vmatprep.subr.mxu0 0.0
    %336 = vmatpush1.xpose.msra.mxu0 %v319
    %337 = vmatprep.subr.mxu0 0.0
    %338 = vmatpush1.xpose.msra.mxu0 %v321
    %339 = vmatprep.subr.mxu0 0.0
    %340 = vmatpush1.xpose.msra.mxu0 %v323
    %341 = vmatprep.subr.mxu0 0.0
    %342 = vmatpush1.xpose.msra.mxu0 %v325
    %343 = vmatprep.subr.mxu0 0.0
    %344 = vmatpush1.xpose.msra.mxu0 %v327
    %345 = vmatprep.subr.mxu0 0.0
    %346 = vmatpush1.xpose.msra.mxu0 %v329
    %347 = vmatprep.subr.mxu0 0.0
    %348 = vmatpush1.xpose.msra.mxu0 0.0
    %349 = vmatprep.subr.mxu0 0.0
    %350 = vmatpush1.xpose.msra.mxu0 0.0
    %351 = vmatprep.subr.mxu0 0.0
    %352 = vmatpush1.xpose.msra.mxu0 0.0
    %353 = vmatprep.subr.mxu0 0.0
    %354 = vmatpush1.xpose.msra.mxu0 0.0
    %355 = vmatprep.subr.mxu0 0.0
    %356 = vmatpush1.xpose.msra.mxu0 0.0
    %357 = vmatprep.subr.mxu0 0.0
    %358 = vmatpush1.xpose.msra.mxu0 0.0
    %359 = vmatprep.subr.mxu0 0.0
    %360 = vmatpush1.xpose.msra.mxu0 0.0
    %361 = vmatprep.subr.mxu0 0.0
    %362 = vmatpush1.xpose.msra.mxu0 0.0
    %363 = vmatprep.subr.mxu0 0.0
    %364 = vmatpush1.xpose.msra.mxu0 0.0
    %365 = vmatprep.subr.mxu0 0.0
    %366 = vmatpush1.xpose.msra.mxu0 0.0
    %367 = vmatprep.subr.mxu0 0.0
    %368 = vmatpush1.xpose.msra.mxu0 0.0
    %369 = vmatprep.subr.mxu0 0.0
    %370 = vmatpush1.xpose.msra.mxu0 0.0
    %371 = vmatprep.subr.mxu0 0.0
    %372 = vmatpush1.xpose.msra.mxu0 0.0
    %373 = vmatprep.subr.mxu0 0.0
    %374 = vmatpush1.xpose.msra.mxu0 0.0
    %375 = vmatprep.subr.mxu0 0.0
    %376 = vmatpush1.xpose.msra.mxu0 0.0
    %377 = vmatprep.subr.mxu0 0.0
    %378 = vmatpush1.xpose.msra.mxu0 0.0
    %379 = vmatprep.subr.mxu0 0.0
    %380 = vmatpush1.xpose.msra.mxu0 0.0
    %381 = vmatprep.subr.mxu0 0.0
    %382 = vmatpush1.xpose.msra.mxu0 0.0
    %383 = vmatprep.subr.mxu0 0.0
    %384 = vmatpush1.xpose.msra.mxu0 0.0
    %385 = vmatprep.subr.mxu0 0.0
    %386 = vmatpush1.xpose.msra.mxu0 0.0
    %387 = vmatprep.subr.mxu0 0.0
    %388 = vmatpush1.xpose.msra.mxu0 0.0
    %389 = vmatprep.subr.mxu0 0.0
    %390 = vmatpush1.xpose.msra.mxu0 0.0
    %391 = vmatprep.subr.mxu0 0.0
    %392 = vmatpush1.xpose.msra.mxu0 0.0
    %393 = vmatprep.subr.mxu0 0.0
    %394 = vmatpush1.xpose.msra.mxu0 0.0
    %395 = vmatprep.mubr.f32.mxu0 0.0
    %396 = vmatmul.mubr.f32.gmra.mrb[0].mxu0 %v310
    %v397 = vpop.f32.mrb[0].mxu0
    %v398 = vadd.f32 %v304, %v397
    %v399 = vpop.f32.mrb[0].mxu0
    %400 = vmatprep.mubr.f32.mxu0 0.0
    %401 = vmatmul.mubr.f32.gmra.mrb[0].mxu0 %v313
    %v402 = vpop.f32.mrb[0].mxu0
    %v403 = vadd.f32 %v306, %v402
    %v404 = vpop.f32.mrb[0].mxu0
    %405 = vdwg.mxu0
    %vm406 = vcmask 523264
    %v407 = vsel %vm406, %v398, -inf
    %408 = vmax.xlane.f32.xlu0 %v407
    %v409 = vpop.xlane.xlu0 %408
    %v410 = vsel %vm406, %v403, -inf
    %411 = vmax.xlane.f32.xlu0 %v410
    %v412 = vpop.xlane.xlu0 %411
    %v413 = vsub.f32 %v398, %v409
    %v414 = vsub.f32 %v403, %v412
    %v415 = vmul.f32 %v413, 1.442695
    %v416 = vpow.pop %v415
    %v417 = vmul.f32 %v414, 1.442695
    %v418 = vpow.pop %v417
    %427 = vrot.lane.b32.xlu0 %v267, 64
    %v428 = vpop.permute.xlu0 %427
    %429 = vrot.lane.b32.xlu0 %v268, 64
    %v430 = vpop.permute.xlu0 %429
    %431 = vrot.lane.b32.xlu0 %v269, 64
    %v432 = vpop.permute.xlu0 %431
    %433 = vrot.lane.b32.xlu0 %v270, 64
    %v434 = vpop.permute.xlu0 %433
    %435 = vrot.lane.b32.xlu0 %v271, 64
    %v436 = vpop.permute.xlu0 %435
    %437 = vrot.lane.b32.xlu0 %v272, 64
    %v438 = vpop.permute.xlu0 %437
    %439 = vrot.lane.b32.xlu0 %v273, 64
    %v440 = vpop.permute.xlu0 %439
    %441 = vrot.lane.b32.xlu0 %v274, 64
    %v442 = vpop.permute.xlu0 %441
    %v452 = vsel %vm406, %v416, 0
    %v455 = vsel %vm406, %v418, 0
    %457 = vmatprep.subr.mxu0 0.0
    %458 = vmatpush1.msra.mxu0 %v428
    %459 = vmatprep.subr.mxu0 0.0
    %460 = vmatpush1.msra.mxu0 %v430
    %461 = vmatprep.subr.mxu0 0.0
    %462 = vmatpush1.msra.mxu0 %v432
    %463 = vmatprep.subr.mxu0 0.0
    %464 = vmatpush1.msra.mxu0 %v434
    %465 = vmatprep.subr.mxu0 0.0
    %466 = vmatpush1.msra.mxu0 %v436
    %467 = vmatprep.subr.mxu0 0.0
    %468 = vmatpush1.msra.mxu0 %v438
    %469 = vmatprep.subr.mxu0 0.0
    %470 = vmatpush1.msra.mxu0 %v440
    %471 = vmatprep.subr.mxu0 0.0
    %472 = vmatpush1.msra.mxu0 %v442
    %473 = vmatprep.subr.mxu0 0.0
    %474 = vmatpush1.msra.mxu0 0.0
    %475 = vmatprep.subr.mxu0 0.0
    %476 = vmatpush1.msra.mxu0 0.0
    %477 = vmatprep.subr.mxu0 0.0
    %478 = vmatpush1.msra.mxu0 0.0
    %479 = vmatprep.subr.mxu0 0.0
    %480 = vmatpush1.msra.mxu0 0.0
    %481 = vmatprep.subr.mxu0 0.0
    %482 = vmatpush1.msra.mxu0 0.0
    %483 = vmatprep.subr.mxu0 0.0
    %484 = vmatpush1.msra.mxu0 0.0
    %485 = vmatprep.subr.mxu0 0.0
    %486 = vmatpush1.msra.mxu0 0.0
    %487 = vmatprep.subr.mxu0 0.0
    %488 = vmatpush1.msra.mxu0 0.0
    %489 = vmatprep.subr.mxu0 0.0
    %490 = vmatpush1.msra.mxu0 0.0
    %491 = vmatprep.subr.mxu0 0.0
    %492 = vmatpush1.msra.mxu0 0.0
    %493 = vmatprep.subr.mxu0 0.0
    %494 = vmatpush1.msra.mxu0 0.0
    %495 = vmatprep.subr.mxu0 0.0
    %496 = vmatpush1.msra.mxu0 0.0
    %497 = vmatprep.subr.mxu0 0.0
    %498 = vmatpush1.msra.mxu0 0.0
    %499 = vmatprep.subr.mxu0 0.0
    %500 = vmatpush1.msra.mxu0 0.0
    %501 = vmatprep.subr.mxu0 0.0
    %502 = vmatpush1.msra.mxu0 0.0
    %503 = vmatprep.subr.mxu0 0.0
    %504 = vmatpush1.msra.mxu0 0.0
    %505 = vmatprep.subr.mxu0 0.0
    %506 = vmatpush1.msra.mxu0 0.0
    %507 = vmatprep.subr.mxu0 0.0
    %508 = vmatpush1.msra.mxu0 0.0
    %509 = vmatprep.subr.mxu0 0.0
    %510 = vmatpush1.msra.mxu0 0.0
    %511 = vmatprep.subr.mxu0 0.0
    %512 = vmatpush1.msra.mxu0 0.0
    %513 = vmatprep.subr.mxu0 0.0
    %514 = vmatpush1.msra.mxu0 0.0
    %515 = vmatprep.subr.mxu0 0.0
    %516 = vmatpush1.msra.mxu0 0.0
    %517 = vmatprep.subr.mxu0 0.0
    %518 = vmatpush1.msra.mxu0 0.0
    %519 = vmatprep.subr.mxu0 0.0
    %520 = vmatpush1.msra.mxu0 0.0
    %521 = vmatprep.mubr.f32.mxu0 0.0
    %522 = vmatmul.mubr.f32.gmra.mrb[0].mxu0 %v452
    %v523 = vpop.f32.mrb[0].mxu0
    %v524 = vadd.f32 0.0, %v523
    %v525 = vpop.f32.mrb[0].mxu0
    %526 = vmatprep.mubr.f32.mxu0 0.0
    %527 = vmatmul.mubr.f32.gmra.mrb[0].mxu0 %v455
    %v528 = vpop.f32.mrb[0].mxu0
    %v529 = vadd.f32 0.0, %v528
    %v530 = vpop.f32.mrb[0].mxu0
    %531 = vdwg.mxu0
    %532 = vrot.lane.b32.xlu0 %v219, 96
    %v533 = vpop.permute.xlu0 %532
    %534 = vrot.lane.b32.xlu0 %v220, 96
    %v535 = vpop.permute.xlu0 %534
    %536 = vrot.lane.b32.xlu0 %v221, 96
    %v537 = vpop.permute.xlu0 %536
    %538 = vrot.lane.b32.xlu0 %v222, 96
    %v539 = vpop.permute.xlu0 %538
    %540 = vrot.lane.b32.xlu0 %v223, 96
    %v541 = vpop.permute.xlu0 %540
    %542 = vrot.lane.b32.xlu0 %v224, 96
    %v543 = vpop.permute.xlu0 %542
    %544 = vrot.lane.b32.xlu0 %v225, 96
    %v545 = vpop.permute.xlu0 %544
    %546 = vrot.lane.b32.xlu0 %v226, 96
    %v547 = vpop.permute.xlu0 %546
    %556 = vmatprep.subr.mxu0 0.0
    %557 = vmatpush1.msra.mxu0 %v533
    %558 = vmatprep.subr.mxu0 0.0
    %559 = vmatpush1.msra.mxu0 %v535
    %560 = vmatprep.subr.mxu0 0.0
    %561 = vmatpush1.msra.mxu0 %v537
    %562 = vmatprep.subr.mxu0 0.0
    %563 = vmatpush1.msra.mxu0 %v539
    %564 = vmatprep.subr.mxu0 0.0
    %565 = vmatpush1.msra.mxu0 %v541
    %566 = vmatprep.subr.mxu0 0.0
    %567 = vmatpush1.msra.mxu0 %v543
    %568 = vmatprep.subr.mxu0 0.0
    %569 = vmatpush1.msra.mxu0 %v545
    %570 = vmatprep.subr.mxu0 0.0
    %571 = vmatpush1.msra.mxu0 %v547
    %572 = vmatprep.subr.mxu0 0.0
    %573 = vmatpush1.msra.mxu0 0.0
    %574 = vmatprep.subr.mxu0 0.0
    %575 = vmatpush1.msra.mxu0 0.0
    %576 = vmatprep.subr.mxu0 0.0
    %577 = vmatpush1.msra.mxu0 0.0
    %578 = vmatprep.subr.mxu0 0.0
    %579 = vmatpush1.msra.mxu0 0.0
    %580 = vmatprep.subr.mxu0 0.0
    %581 = vmatpush1.msra.mxu0 0.0
    %582 = vmatprep.subr.mxu0 0.0
    %583 = vmatpush1.msra.mxu0 0.0
    %584 = vmatprep.subr.mxu0 0.0
    %585 = vmatpush1.msra.mxu0 0.0
    %586 = vmatprep.subr.mxu0 0.0
    %587 = vmatpush1.msra.mxu0 0.0
    %588 = vmatprep.subr.mxu0 0.0
    %589 = vmatpush1.msra.mxu0 0.0
    %590 = vmatprep.subr.mxu0 0.0
    %591 = vmatpush1.msra.mxu0 0.0
    %592 = vmatprep.subr.mxu0 0.0
    %593 = vmatpush1.msra.mxu0 0.0
    %594 = vmatprep.subr.mxu0 0.0
    %595 = vmatpush1.msra.mxu0 0.0
    %596 = vmatprep.subr.mxu0 0.0
    %597 = vmatpush1.msra.mxu0 0.0
    %598 = vmatprep.subr.mxu0 0.0
    %599 = vmatpush1.msra.mxu0 0.0
    %600 = vmatprep.subr.mxu0 0.0
    %601 = vmatpush1.msra.mxu0 0.0
    %602 = vmatprep.subr.mxu0 0.0
    %603 = vmatpush1.msra.mxu0 0.0
    %604 = vmatprep.subr.mxu0 0.0
    %605 = vmatpush1.msra.mxu0 0.0
    %606 = vmatprep.subr.mxu0 0.0
    %607 = vmatpush1.msra.mxu0 0.0
    %608 = vmatprep.subr.mxu0 0.0
    %609 = vmatpush1.msra.mxu0 0.0
    %610 = vmatprep.subr.mxu0 0.0
    %611 = vmatpush1.msra.mxu0 0.0
    %612 = vmatprep.subr.mxu0 0.0
    %613 = vmatpush1.msra.mxu0 0.0
    %614 = vmatprep.subr.mxu0 0.0
    %615 = vmatpush1.msra.mxu0 0.0
    %616 = vmatprep.subr.mxu0 0.0
    %617 = vmatpush1.msra.mxu0 0.0
    %618 = vmatprep.subr.mxu0 0.0
    %619 = vmatpush1.msra.mxu0 0.0
    %620 = vmatprep.mubr.f32.mxu0 0.0
    %621 = vmatmul.mubr.f32.gmra.mrb[0].mxu0 %v452
    %v622 = vpop.f32.mrb[0].mxu0
    %v623 = vadd.f32 0.0, %v622
    %v624 = vpop.f32.mrb[0].mxu0
    %625 = vmatprep.mubr.f32.mxu0 0.0
    %626 = vmatmul.mubr.f32.gmra.mrb[0].mxu0 %v455
    %v627 = vpop.f32.mrb[0].mxu0
    %v628 = vadd.f32 0.0, %v627
    %v629 = vpop.f32.mrb[0].mxu0
    %630 = vdwg.mxu0
    %v631 = vrcp.pop %v623
    %v632 = vrcp.pop %v628
    %v633 = vmul.f32 %v524, %v631
    %v634 = vmul.f32 %v529, %v632
    %639 = vrot.lane.b32.xlu0 %v131, 32
    %v640 = vpop.permute.xlu0 %639
    %641 = vrot.lane.b32.xlu0 %v132, 32
    %v642 = vpop.permute.xlu0 %641
    %643 = vrot.lane.b32.xlu0 %v133, 32
    %v644 = vpop.permute.xlu0 %643
    %645 = vrot.lane.b32.xlu0 %v134, 32
    %v646 = vpop.permute.xlu0 %645
    %651 = vrot.lane.b32.xlu0 %v46, 32
    %v652 = vpop.permute.xlu0 %651
    %653 = vrot.lane.b32.xlu0 %v47, 32
    %v654 = vpop.permute.xlu0 %653
    %v658 = vsel %vm137, %v633, 0
    %v661 = vsel %vm137, %v634, 0
    %663 = vmatprep.subr.mxu0 0.0
    %664 = vmatpush1.msra.mxu0 %v640
    %665 = vmatprep.subr.mxu0 0.0
    %666 = vmatpush1.msra.mxu0 %v642
    %667 = vmatprep.subr.mxu0 0.0
    %668 = vmatpush1.msra.mxu0 %v644
    %669 = vmatprep.subr.mxu0 0.0
    %670 = vmatpush1.msra.mxu0 %v646
    %671 = vmatprep.subr.mxu0 0.0
    %672 = vmatpush1.msra.mxu0 0.0
    %673 = vmatprep.subr.mxu0 0.0
    %674 = vmatpush1.msra.mxu0 0.0
    %675 = vmatprep.subr.mxu0 0.0
    %676 = vmatpush1.msra.mxu0 0.0
    %677 = vmatprep.subr.mxu0 0.0
    %678 = vmatpush1.msra.mxu0 0.0
    %679 = vmatprep.subr.mxu0 0.0
    %680 = vmatpush1.msra.mxu0 0.0
    %681 = vmatprep.subr.mxu0 0.0
    %682 = vmatpush1.msra.mxu0 0.0
    %683 = vmatprep.subr.mxu0 0.0
    %684 = vmatpush1.msra.mxu0 0.0
    %685 = vmatprep.subr.mxu0 0.0
    %686 = vmatpush1.msra.mxu0 0.0
    %687 = vmatprep.subr.mxu0 0.0
    %688 = vmatpush1.msra.mxu0 0.0
    %689 = vmatprep.subr.mxu0 0.0
    %690 = vmatpush1.msra.mxu0 0.0
    %691 = vmatprep.subr.mxu0 0.0
    %692 = vmatpush1.msra.mxu0 0.0
    %693 = vmatprep.subr.mxu0 0.0
    %694 = vmatpush1.msra.mxu0 0.0
    %695 = vmatprep.subr.mxu0 0.0
    %696 = vmatpush1.msra.mxu0 0.0
    %697 = vmatprep.subr.mxu0 0.0
    %698 = vmatpush1.msra.mxu0 0.0
    %699 = vmatprep.subr.mxu0 0.0
    %700 = vmatpush1.msra.mxu0 0.0
    %701 = vmatprep.subr.mxu0 0.0
    %702 = vmatpush1.msra.mxu0 0.0
    %703 = vmatprep.subr.mxu0 0.0
    %704 = vmatpush1.msra.mxu0 0.0
    %705 = vmatprep.subr.mxu0 0.0
    %706 = vmatpush1.msra.mxu0 0.0
    %707 = vmatprep.subr.mxu0 0.0
    %708 = vmatpush1.msra.mxu0 0.0
    %709 = vmatprep.subr.mxu0 0.0
    %710 = vmatpush1.msra.mxu0 0.0
    %711 = vmatprep.subr.mxu0 0.0
    %712 = vmatpush1.msra.mxu0 0.0
    %713 = vmatprep.subr.mxu0 0.0
    %714 = vmatpush1.msra.mxu0 0.0
    %715 = vmatprep.subr.mxu0 0.0
    %716 = vmatpush1.msra.mxu0 0.0
    %717 = vmatprep.subr.mxu0 0.0
    %718 = vmatpush1.msra.mxu0 0.0
    %719 = vmatprep.subr.mxu0 0.0
    %720 = vmatpush1.msra.mxu0 0.0
    %721 = vmatprep.subr.mxu0 0.0
    %722 = vmatpush1.msra.mxu0 0.0
    %723 = vmatprep.subr.mxu0 0.0
    %724 = vmatpush1.msra.mxu0 0.0
    %725 = vmatprep.subr.mxu0 0.0
    %726 = vmatpush1.msra.mxu0 0.0
    %727 = vmatprep.mubr.f32.mxu0 0.0
    %728 = vmatmul.mubr.f32.gmra.mrb[0].mxu0 %v658
    %v729 = vpop.f32.mrb[0].mxu0
    %v730 = vadd.f32 %v652, %v729
    %v731 = vpop.f32.mrb[0].mxu0
    %732 = vmatprep.mubr.f32.mxu0 0.0
    %733 = vmatmul.mubr.f32.gmra.mrb[0].mxu0 %v661
    %v734 = vpop.f32.mrb[0].mxu0
    %v735 = vadd.f32 %v654, %v734
    %v736 = vpop.f32.mrb[0].mxu0
    %737 = vdwg.mxu0
    %v738 = vadd.f32 %v123, %v730
    %v739 = vadd.f32 %v128, %v735
    %v740 = vsel %vm137, %v738, 0.0
    %741 = vadd.xlane.f32.xlu0 %v740
    %v742 = vpop.xlane.xlu0 %741
    %v743 = vsel %vm137, %v739, 0.0
    %744 = vadd.xlane.f32.xlu0 %v743
    %v745 = vpop.xlane.xlu0 %744
    %v746 = vrcp.pop 32.0
    %v747 = vmul.f32 %v742, %v746
    %v748 = vmul.f32 %v745, %v746
    %v749 = vsub.f32 %v738, %v747
    %v750 = vsub.f32 %v739, %v748
    %v751 = vmul.f32 %v749, %v749
    %v752 = vmul.f32 %v750, %v750
    %v753 = vsel %vm137, %v751, 0.0
    %754 = vadd.xlane.f32.xlu0 %v753
    %v755 = vpop.xlane.xlu0 %754
    %v756 = vsel %vm137, %v752, 0.0
    %757 = vadd.xlane.f32.xlu0 %v756
    %v758 = vpop.xlane.xlu0 %757
    %v759 = vmul.f32 %v755, %v746
    %v760 = vmul.f32 %v758, %v746
    %v761 = vadd.f32 %v759, 1e-05
    %v762 = vadd.f32 %v760, 1e-05
    %v763 = vrsqrt.pop %v761
    %v764 = vrsqrt.pop %v762
    %v765 = vmul.f32 %v749, %v763
    %v766 = vmul.f32 %v750, %v764
    %v767 = vld [vmem:[#allocation2 + $0x90] sm:$0xff]
    %v768 = vld [vmem:[#allocation2 + $0x98] sm:$0xff]
    %771 = vrot.lane.b32.xlu0 %v767, 64
    %v772 = vpop.permute.xlu0 %771
    %773 = vrot.lane.b32.xlu0 %v768, 64
    %v774 = vpop.permute.xlu0 %773
    %v777 = vmul.f32 %v765, %v772
    %v778 = vmul.f32 %v766, %v774
    %779 = vrot.lane.b32.xlu0 %v767, 32
    %v780 = vpop.permute.xlu0 %779
    %781 = vrot.lane.b32.xlu0 %v768, 32
    %v782 = vpop.permute.xlu0 %781
    %v785 = vadd.f32 %v777, %v780
    %v786 = vadd.f32 %v778, %v782
    %v787 = vld [vmem:[#allocation2 + $0x60] sm:$0xff]
    %v788 = vld [vmem:[#allocation2 + $0x68] sm:$0xff]
    %v789 = vld [vmem:[#allocation2 + $0x70] sm:$0xff]
    %v790 = vld [vmem:[#allocation2 + $0x78] sm:$0xff]
    %793 = vrot.lane.b32.xlu0 %v789, 64
    %v794 = vpop.permute.xlu0 %793
    %795 = vrot.lane.b32.xlu0 %v790, 64
    %v796 = vpop.permute.xlu0 %795
    %v800 = vsel %vm137, %v785, 0
    %v803 = vsel %vm137, %v786, 0
    %805 = vmatprep.subr.mxu0 0.0
    %806 = vmatpush1.msra.mxu0 %v787
    %807 = vmatprep.subr.mxu0 0.0
    %808 = vmatpush1.msra.mxu0 %v788
    %809 = vmatprep.subr.mxu0 0.0
    %810 = vmatpush1.msra.mxu0 %v789
    %811 = vmatprep.subr.mxu0 0.0
    %812 = vmatpush1.msra.mxu0 %v790
    %813 = vmatprep.subr.mxu0 0.0
    %814 = vmatpush1.msra.mxu0 0.0
    %815 = vmatprep.subr.mxu0 0.0
    %816 = vmatpush1.msra.mxu0 0.0
    %817 = vmatprep.subr.mxu0 0.0
    %818 = vmatpush1.msra.mxu0 0.0
    %819 = vmatprep.subr.mxu0 0.0
    %820 = vmatpush1.msra.mxu0 0.0
    %821 = vmatprep.subr.mxu0 0.0
    %822 = vmatpush1.msra.mxu0 0.0
    %823 = vmatprep.subr.mxu0 0.0
    %824 = vmatpush1.msra.mxu0 0.0
    %825 = vmatprep.subr.mxu0 0.0
    %826 = vmatpush1.msra.mxu0 0.0
    %827 = vmatprep.subr.mxu0 0.0
    %828 = vmatpush1.msra.mxu0 0.0
    %829 = vmatprep.subr.mxu0 0.0
    %830 = vmatpush1.msra.mxu0 0.0
    %831 = vmatprep.subr.mxu0 0.0
    %832 = vmatpush1.msra.mxu0 0.0
    %833 = vmatprep.subr.mxu0 0.0
    %834 = vmatpush1.msra.mxu0 0.0
    %835 = vmatprep.subr.mxu0 0.0
    %836 = vmatpush1.msra.mxu0 0.0
    %837 = vmatprep.subr.mxu0 0.0
    %838 = vmatpush1.msra.mxu0 0.0
    %839 = vmatprep.subr.mxu0 0.0
    %840 = vmatpush1.msra.mxu0 0.0
    %841 = vmatprep.subr.mxu0 0.0
    %842 = vmatpush1.msra.mxu0 0.0
    %843 = vmatprep.subr.mxu0 0.0
    %844 = vmatpush1.msra.mxu0 0.0
    %845 = vmatprep.subr.mxu0 0.0
    %846 = vmatpush1.msra.mxu0 0.0
    %847 = vmatprep.subr.mxu0 0.0
    %848 = vmatpush1.msra.mxu0 0.0
    %849 = vmatprep.subr.mxu0 0.0
    %850 = vmatpush1.msra.mxu0 0.0
    %851 = vmatprep.subr.mxu0 0.0
    %852 = vmatpush1.msra.mxu0 0.0
    %853 = vmatprep.subr.mxu0 0.0
    %854 = vmatpush1.msra.mxu0 0.0
    %855 = vmatprep.subr.mxu0 0.0
    %856 = vmatpush1.msra.mxu0 0.0
    %857 = vmatprep.subr.mxu0 0.0
    %858 = vmatpush1.msra.mxu0 0.0
    %859 = vmatprep.subr.mxu0 0.0
    %860 = vmatpush1.msra.mxu0 0.0
    %861 = vmatprep.subr.mxu0 0.0
    %862 = vmatpush1.msra.mxu0 0.0
    %863 = vmatprep.subr.mxu0 0.0
    %864 = vmatpush1.msra.mxu0 0.0
    %865 = vmatprep.subr.mxu0 0.0
    %866 = vmatpush1.msra.mxu0 0.0
    %867 = vmatprep.subr.mxu0 0.0
    %868 = vmatpush1.msra.mxu0 0.0
    %869 = vmatprep.mubr.f32.mxu0 0.0
    %870 = vmatmul.mubr.f32.gmra.mrb[0].mxu0 %v800
    %v871 = vpop.f32.mrb[0].mxu0
    %v872 = vadd.f32 %v794, %v871
    %v873 = vpop.f32.mrb[0].mxu0
    %874 = vmatprep.mubr.f32.mxu0 0.0
    %875 = vmatmul.mubr.f32.gmra.mrb[0].mxu0 %v803
    %v876 = vpop.f32.mrb[0].mxu0
    %v877 = vadd.f32 %v796, %v876
    %v878 = vpop.f32.mrb[0].mxu0
    %879 = vdwg.mxu0
    %v880 = vmax.f32 %v872, 0.0
    %v881 = vmax.f32 %v877, 0.0
    %v882 = vld [vmem:[#allocation2 + $0xa0] sm:$0xff]
    %v883 = vld [vmem:[#allocation2 + $0xa8] sm:$0xff]
    %886 = vrot.lane.b32.xlu0 %v882, 64
    %v887 = vpop.permute.xlu0 %886
    %888 = vrot.lane.b32.xlu0 %v883, 64
    %v889 = vpop.permute.xlu0 %888
    %v893 = vsel %vm406, %v880, 0
    %v896 = vsel %vm406, %v881, 0
    %898 = vmatprep.subr.mxu0 0.0
    %899 = vmatpush1.msra.mxu0 %v219
    %900 = vmatprep.subr.mxu0 0.0
    %901 = vmatpush1.msra.mxu0 %v220
    %902 = vmatprep.subr.mxu0 0.0
    %903 = vmatpush1.msra.mxu0 %v221
    %904 = vmatprep.subr.mxu0 0.0
    %905 = vmatpush1.msra.mxu0 %v222
    %906 = vmatprep.subr.mxu0 0.0
    %907 = vmatpush1.msra.mxu0 %v223
    %908 = vmatprep.subr.mxu0 0.0
    %909 = vmatpush1.msra.mxu0 %v224
    %910 = vmatprep.subr.mxu0 0.0
    %911 = vmatpush1.msra.mxu0 %v225
    %912 = vmatprep.subr.mxu0 0.0
    %913 = vmatpush1.msra.mxu0 %v226
    %914 = vmatprep.subr.mxu0 0.0
    %915 = vmatpush1.msra.mxu0 0.0
    %916 = vmatprep.subr.mxu0 0.0
    %917 = vmatpush1.msra.mxu0 0.0
    %918 = vmatprep.subr.mxu0 0.0
    %919 = vmatpush1.msra.mxu0 0.0
    %920 = vmatprep.subr.mxu0 0.0
    %921 = vmatpush1.msra.mxu0 0.0
    %922 = vmatprep.subr.mxu0 0.0
    %923 = vmatpush1.msra.mxu0 0.0
    %924 = vmatprep.subr.mxu0 0.0
    %925 = vmatpush1.msra.mxu0 0.0
    %926 = vmatprep.subr.mxu0 0.0
    %927 = vmatpush1.msra.mxu0 0.0
    %928 = vmatprep.subr.mxu0 0.0
    %929 = vmatpush1.msra.mxu0 0.0
    %930 = vmatprep.subr.mxu0 0.0
    %931 = vmatpush1.msra.mxu0 0.0
    %932 = vmatprep.subr.mxu0 0.0
    %933 = vmatpush1.msra.mxu0 0.0
    %934 = vmatprep.subr.mxu0 0.0
    %935 = vmatpush1.msra.mxu0 0.0
    %936 = vmatprep.subr.mxu0 0.0
    %937 = vmatpush1.msra.mxu0 0.0
    %938 = vmatprep.subr.mxu0 0.0
    %939 = vmatpush1.msra.mxu0 0.0
    %940 = vmatprep.subr.mxu0 0.0
    %941 = vmatpush1.msra.mxu0 0.0
    %942 = vmatprep.subr.mxu0 0.0
    %943 = vmatpush1.msra.mxu0 0.0
    %944 = vmatprep.subr.mxu0 0.0
    %945 = vmatpush1.msra.mxu0 0.0
    %946 = vmatprep.subr.mxu0 0.0
    %947 = vmatpush1.msra.mxu0 0.0
    %948 = vmatprep.subr.mxu0 0.0
    %949 = vmatpush1.msra.mxu0 0.0
    %950 = vmatprep.subr.mxu0 0.0
    %951 = vmatpush1.msra.mxu0 0.0
    %952 = vmatprep.subr.mxu0 0.0
    %953 = vmatpush1.msra.mxu0 0.0
    %954 = vmatprep.subr.mxu0 0.0
    %955 = vmatpush1.msra.mxu0 0.0
    %956 = vmatprep.subr.mxu0 0.0
    %957 = vmatpush1.msra.mxu0 0.0
    %958 = vmatprep.subr.mxu0 0.0
    %959 = vmatpush1.msra.mxu0 0.0
    %960 = vmatprep.subr.mxu0 0.0
    %961 = vmatpush1.msra.mxu0 0.0
    %962 = vmatprep.mubr.f32.mxu0 0.0
    %963 = vmatmul.mubr.f32.gmra.mrb[0].mxu0 %v893
    %v964 = vpop.f32.mrb[0].mxu0
    %v965 = vadd.f32 %v887, %v964
    %v966 = vpop.f32.mrb[0].mxu0
    %967 = vmatprep.mubr.f32.mxu0 0.0
    %968 = vmatmul.mubr.f32.gmra.mrb[0].mxu0 %v896
    %v969 = vpop.f32.mrb[0].mxu0
    %v970 = vadd.f32 %v889, %v969
    %v971 = vpop.f32.mrb[0].mxu0
    %972 = vdwg.mxu0
    %v973 = vadd.f32 %v785, %v965
    %v974 = vadd.f32 %v786, %v970
    %v975 = vsel %vm137, %v973, 0.0
    %976 = vadd.xlane.f32.xlu0 %v975
    %v977 = vpop.xlane.xlu0 %976
    %v978 = vsel %vm137, %v974, 0.0
    %979 = vadd.xlane.f32.xlu0 %v978
    %v980 = vpop.xlane.xlu0 %979
    %v981 = vmul.f32 %v977, %v746
    %v982 = vmul.f32 %v980, %v746
    %v983 = vsub.f32 %v973, %v981
    %v984 = vsub.f32 %v974, %v982
    %v985 = vmul.f32 %v983, %v983
    %v986 = vmul.f32 %v984, %v984
    %v987 = vsel %vm137, %v985, 0.0
    %988 = vadd.xlane.f32.xlu0 %v987
    %v989 = vpop.xlane.xlu0 %988
    %v990 = vsel %vm137, %v986, 0.0
    %991 = vadd.xlane.f32.xlu0 %v990
    %v992 = vpop.xlane.xlu0 %991
    %v993 = vmul.f32 %v989, %v746
    %v994 = vmul.f32 %v992, %v746
    %v995 = vadd.f32 %v993, 1e-05
    %v996 = vadd.f32 %v994, 1e-05
    %v997 = vrsqrt.pop %v995
    %v998 = vrsqrt.pop %v996
    %v999 = vmul.f32 %v983, %v997
    %v1000 = vmul.f32 %v984, %v998
    %v1001 = vld [vmem:[#allocation2 + $0x40] sm:$0xff]
    %v1002 = vld [vmem:[#allocation2 + $0x48] sm:$0xff]
    %v1003 = vld [vmem:[#allocation2 + $0x50] sm:$0xff]
    %v1004 = vld [vmem:[#allocation2 + $0x58] sm:$0xff]
    %v1005 = vld [vmem:[#allocation2 + $0xd0] sm:$0xff]
    %v1006 = vld [vmem:[#allocation2 + $0xd8] sm:$0xff]
    %v1008 = vsel %vm137, %v999, 0
    %v1011 = vsel %vm137, %v1000, 0
    %1013 = vmatprep.subr.mxu0 0.0
    %1014 = vmatpush1.msra.mxu0 %v1001
    %1015 = vmatprep.subr.mxu0 0.0
    %1016 = vmatpush1.msra.mxu0 %v1002
    %1017 = vmatprep.subr.mxu0 0.0
    %1018 = vmatpush1.msra.mxu0 %v1003
    %1019 = vmatprep.subr.mxu0 0.0
    %1020 = vmatpush1.msra.mxu0 %v1004
    %1021 = vmatprep.subr.mxu0 0.0
    %1022 = vmatpush1.msra.mxu0 0.0
    %1023 = vmatprep.subr.mxu0 0.0
    %1024 = vmatpush1.msra.mxu0 0.0
    %1025 = vmatprep.subr.mxu0 0.0
    %1026 = vmatpush1.msra.mxu0 0.0
    %1027 = vmatprep.subr.mxu0 0.0
    %1028 = vmatpush1.msra.mxu0 0.0
    %1029 = vmatprep.subr.mxu0 0.0
    %1030 = vmatpush1.msra.mxu0 0.0
    %1031 = vmatprep.subr.mxu0 0.0
    %1032 = vmatpush1.msra.mxu0 0.0
    %1033 = vmatprep.subr.mxu0 0.0
    %1034 = vmatpush1.msra.mxu0 0.0
    %1035 = vmatprep.subr.mxu0 0.0
    %1036 = vmatpush1.msra.mxu0 0.0
    %1037 = vmatprep.subr.mxu0 0.0
    %1038 = vmatpush1.msra.mxu0 0.0
    %1039 = vmatprep.subr.mxu0 0.0
    %1040 = vmatpush1.msra.mxu0 0.0
    %1041 = vmatprep.subr.mxu0 0.0
    %1042 = vmatpush1.msra.mxu0 0.0
    %1043 = vmatprep.subr.mxu0 0.0
    %1044 = vmatpush1.msra.mxu0 0.0
    %1045 = vmatprep.subr.mxu0 0.0
    %1046 = vmatpush1.msra.mxu0 0.0
    %1047 = vmatprep.subr.mxu0 0.0
    %1048 = vmatpush1.msra.mxu0 0.0
    %1049 = vmatprep.subr.mxu0 0.0
    %1050 = vmatpush1.msra.mxu0 0.0
    %1051 = vmatprep.subr.mxu0 0.0
    %1052 = vmatpush1.msra.mxu0 0.0
    %1053 = vmatprep.subr.mxu0 0.0
    %1054 = vmatpush1.msra.mxu0 0.0
    %1055 = vmatprep.subr.mxu0 0.0
    %1056 = vmatpush1.msra.mxu0 0.0
    %1057 = vmatprep.subr.mxu0 0.0
    %1058 = vmatpush1.msra.mxu0 0.0
    %1059 = vmatprep.subr.mxu0 0.0
    %1060 = vmatpush1.msra.mxu0 0.0
    %1061 = vmatprep.subr.mxu0 0.0
    %1062 = vmatpush1.msra.mxu0 0.0
    %1063 = vmatprep.subr.mxu0 0.0
    %1064 = vmatpush1.msra.mxu0 0.0
    %1065 = vmatprep.subr.mxu0 0.0
    %1066 = vmatpush1.msra.mxu0 0.0
    %1067 = vmatprep.subr.mxu0 0.0
    %1068 = vmatpush1.msra.mxu0 0.0
    %1069 = vmatprep.subr.mxu0 0.0
    %1070 = vmatpush1.msra.mxu0 0.0
    %1071 = vmatprep.subr.mxu0 0.0
    %1072 = vmatpush1.msra.mxu0 0.0
    %1073 = vmatprep.subr.mxu0 0.0
    %1074 = vmatpush1.msra.mxu0 0.0
    %1075 = vmatprep.subr.mxu0 0.0
    %1076 = vmatpush1.msra.mxu0 0.0
    %1077 = vmatprep.mubr.f32.mxu0 0.0
    %1078 = vmatmul.mubr.f32.gmra.mrb[0].mxu0 %v1008
    %v1079 = vpop.f32.mrb[0].mxu0
    %v1080 = vadd.f32 %v1005, %v1079
    %v1081 = vpop.f32.mrb[0].mxu0
    %1082 = vmatprep.mubr.f32.mxu0 0.0
    %1083 = vmatmul.mubr.f32.gmra.mrb[0].mxu0 %v1011
    %v1084 = vpop.f32.mrb[0].mxu0
    %v1085 = vadd.f32 %v1006, %v1084
    %v1086 = vpop.f32.mrb[0].mxu0
    %1087 = vdwg.mxu0
    %1088 = vmax.xlane.f32.xlu0 %v1080
    %v1089 = vpop.xlane.xlu0 %1088
    %1090 = vmax.xlane.f32.xlu0 %v1085
    %v1091 = vpop.xlane.xlu0 %1090
    %v1092 = vsub.f32 %v1080, %v1089
    %v1093 = vsub.f32 %v1085, %v1091
    %v1094 = vmul.f32 %v1092, 1.442695
    %v1095 = vpow.pop %v1094
    %v1096 = vmul.f32 %v1093, 1.442695
    %v1097 = vpow.pop %v1096
    %1098 = vadd.xlane.f32.xlu0 %v1095
    %v1099 = vpop.xlane.xlu0 %1098
    %1100 = vadd.xlane.f32.xlu0 %v1097
    %v1101 = vpop.xlane.xlu0 %1100
    %v1102 = vlog2.pop %v1099
    %v1103 = vmul.f32 %v1102, 0.6931472
    %v1104 = vlog2.pop %v1101
    %v1105 = vmul.f32 %v1104, 0.6931472
    %v1106 = vsub.f32 %v1092, %v1103
    %v1107 = vsub.f32 %v1093, %v1105
    %1108 = vst [vmem:[#allocation5] sm:$0xff] %v1106
    %1109 = vst [vmem:[#allocation5 + $0x8] sm:$0xff] %v1107
    // Predicated region
    $region14: #{transformer_decoder_forward.1} parent=1 // pred_check
      _
    $region15: #{transformer_decoder_forward.1} parent=1 // pred_check_branch
      %1111 = sbr.rel (0) target = $region17
    $region16: #{transformer_decoder_forward.1} parent=1 // pred_region
      %s1113 = ssub.s32 256, 256
      %1114 = vsyncadd [#allocation4], %s1113
      %s1115 = sshll.u32 [#allocation5], 4
      %s1116 = int_to_ptr.vmem [resolvable:$true] %s1115
      %1121 = dma.vmem_to_hbm [thread:$0]  %s1116, 256, %s2, [#allocation4], 128, 128, 8
    $region17: #{transformer_decoder_forward.1} parent=1 // pred_fallthru
      _
    // Predicated region
    $region18: #{transformer_decoder_forward.1} parent=1 // pred_check
      _
    $region19: #{transformer_decoder_forward.1} parent=1 // pred_check_branch
      %1123 = sbr.rel (0) target = $region21
    $region20: #{transformer_decoder_forward.1} parent=1 // pred_region
      %1124 = dma.done [#allocation4], 256
    $region21: #{transformer_decoder_forward.1} parent=1 // pred_fallthru
      _
    %1125 = vsyncpa [#allocation3], 1
    %1126 = vsyncpa [#allocation4], 1

</llo_original>
